<compile_context>
chip_gen: v6e
topology: v6e:2x2x1
jax: 0.10.0
libtpu: 0.0.40
codegen_flags: <defaults>
</compile_context>

<pallas_src>
import jax
import jax.numpy as jnp
from jax.experimental import pallas as pl
from jax.experimental.pallas import tpu as pltpu

EMBED_DIM = 32
N_NODES = 16
M_EDGES = 8
BATCH = 4
LN_EPS = 1e-5
LEAKY_SLOPE = 0.01  # nn.LeakyReLU default negative_slope


def _message_passing_kernel(h_ref, e_ref, src_ref, dst_ref, w_ref, vec_ref, out_ref):
    H = h_ref[...]            # (Bn, d)  f32  -- all graphs stacked
    E = e_ref[...]            # (Bm, d)  f32
    src = src_ref[...]        # (2Bm, 1) i32  = [heads; tails]  (batch-offset)
    dst = dst_ref[...]        # (1, 2Bm) i32  = [tails; heads]  (batch-offset)
    W = w_ref[...]            # (8d, d)  f32  = [Wf^T; Wb^T]
    bf = vec_ref[0:1, :]      # (1, d)
    bb = vec_ref[1:2, :]
    gamma = vec_ref[2:3, :]
    beta = vec_ref[3:4, :]

    Bn, d = H.shape
    Bm = E.shape[0]
    two_m = src.shape[0]      # 2 * Bm

    # ---- MXU op 1: fused gather of H[head] and H[tail] in one matmul.
    gather_iota = jax.lax.broadcasted_iota(jnp.int32, (two_m, Bn), 1)
    G_gather = (gather_iota == src).astype(jnp.float32)              # (2Bm, Bn)
    Hg = jnp.dot(G_gather, H, preferred_element_type=jnp.float32)    # (2Bm, d)

    # ---- MXU op 2: fused fwd/back message linear, K = 8d = 256.
    # fwd rows carry [feats, 0], back rows carry [0, feats]; multiplying by the
    # stacked weight [Wf^T; Wb^T] gives each row exactly its own linear (exact).
    E2 = jnp.concatenate([E, E], axis=0)                             # (2Bm, d)
    feats = jnp.concatenate([Hg, E2, Hg + E2, Hg * E2], axis=1)      # (2Bm, 4d)
    row = jax.lax.broadcasted_iota(jnp.int32, (two_m, 1), 0)
    is_fwd = row < Bm                                                # (2Bm, 1)
    feats_blk = jnp.concatenate(
        [jnp.where(is_fwd, feats, 0.0), jnp.where(is_fwd, 0.0, feats)],
        axis=1)                                                      # (2Bm, 8d)
    bias = jnp.where(is_fwd, bf, bb)                                 # (2Bm, d)
    msgs = jnp.dot(feats_blk, W, preferred_element_type=jnp.float32) + bias

    # ---- MXU op 3: fused scatter-sum + per-node counts.
    # One-hot built directly in (Bn, 2Bm) orientation -> plain (M,K)x(K,N) feed.
    scatter_iota = jax.lax.broadcasted_iota(jnp.int32, (Bn, two_m), 0)
    G_scatter = (scatter_iota == dst).astype(jnp.float32)            # (Bn, 2Bm)
    msgs_ext = jnp.concatenate(
        [msgs, jnp.ones((two_m, 1), jnp.float32)], axis=1)           # (2Bm, d+1)
    agg_ext = jnp.dot(G_scatter, msgs_ext,
                      preferred_element_type=jnp.float32)            # (Bn, d+1)
    agg_sum = agg_ext[:, :d]
    counts = agg_ext[:, d:d + 1]

    # scatter_mean semantics: nodes with zero incoming messages stay 0.
    agg = jnp.where(counts > 0.0, agg_sum / jnp.maximum(counts, 1.0), 0.0)

    # LeakyReLU -> residual -> LayerNorm (biased variance, eps = 1e-5).
    act = jnp.where(agg >= 0.0, agg, LEAKY_SLOPE * agg)
    x = act + H
    inv_d = 1.0 / d
    mu = jnp.sum(x, axis=-1, keepdims=True) * inv_d
    ex2 = jnp.sum(x * x, axis=-1, keepdims=True) * inv_d             # independent of mu
    var = ex2 - mu * mu
    xn = (x - mu) * jax.lax.rsqrt(var + LN_EPS)
    out_ref[...] = xn * gamma + beta


@jax.jit
def message_passing_forward(H, E, ht, params):
    """Batched forward for B independent graphs (one fused block-diagonal graph).

    H : (B, n, d) f32, E : (B, m, d) f32, ht : (B, m, 2) int
    params: Wf (d,4d), bf (d,), Wb (d,4d), bb (d,), gamma (d,), beta (d,)
    Returns (B, n, d) f32.
    """
    B, n, d = H.shape
    m = E.shape[1]

    H_flat = H.reshape(B * n, d).astype(jnp.float32)
    E_flat = E.reshape(B * m, d).astype(jnp.float32)

    offs = (jnp.arange(B, dtype=jnp.int32) * n)[:, None]             # (B, 1)
    heads = (ht[..., 0].astype(jnp.int32) + offs).reshape(B * m)
    tails = (ht[..., 1].astype(jnp.int32) + offs).reshape(B * m)
    # Gather sources as a COLUMN, scatter destinations as a ROW (pre-transposed
    # so the kernel never has to move indices across lanes).
    src_col = jnp.concatenate([heads, tails]).reshape(2 * B * m, 1)
    dst_row = jnp.concatenate([tails, heads]).reshape(1, 2 * B * m)

    # Packed parameter slabs.
    W_stack = jnp.concatenate(
        [params["Wf"].T, params["Wb"].T], axis=0).astype(jnp.float32)  # (8d, d)
    vecs = jnp.stack(
        [params["bf"], params["bb"], params["gamma"], params["beta"]],
        axis=0).astype(jnp.float32)                                    # (4, d)

    vmem = pl.BlockSpec(memory_space=pltpu.MemorySpace.VMEM)
    out_flat = pl.pallas_call(
        _message_passing_kernel,
        out_shape=jax.ShapeDtypeStruct((B * n, d), jnp.float32),
        in_specs=[vmem] * 6,
        out_specs=vmem,
    )(H_flat, E_flat, src_col, dst_row, W_stack, vecs)
    return out_flat.reshape(B, n, d)


def _reference_forward_single(H, E, ht, params):
    d = H.shape[1]

    def calc(Hh, W, b):
        raw = jnp.concatenate([Hh, E, Hh + E, Hh * E], axis=1)
        return raw @ W.T + b

    mf = calc(H[ht[:, 0]], params["Wf"], params["bf"])
    mb = calc(H[ht[:, 1]], params["Wb"], params["bb"])
    msg_dst = jnp.concatenate([ht[:, 1], ht[:, 0]])
    messages = jnp.concatenate([mf, mb], axis=0)
    n = H.shape[0]
    agg_sum = jnp.zeros((n, d), jnp.float32).at[msg_dst].add(messages)
    counts = jnp.zeros((n,), jnp.float32).at[msg_dst].add(1.0)
    agg = jnp.where(counts[:, None] > 0,
                    agg_sum / jnp.maximum(counts, 1.0)[:, None], 0.0)
    act = jnp.where(agg >= 0, agg, LEAKY_SLOPE * agg)
    x = act + H
    mu = x.mean(-1, keepdims=True)
    var = ((x - mu) ** 2).mean(-1, keepdims=True)
    xn = (x - mu) / jnp.sqrt(var + LN_EPS)
    return xn * params["gamma"][None, :] + params["beta"][None, :]


if __name__ == "__main__":
    key = jax.random.PRNGKey(0)
    k_h, k_e, k_ht, k_wf, k_bf, k_wb, k_bb, k_g, k_b = jax.random.split(key, 9)

    d, n, m, B = EMBED_DIM, N_NODES, M_EDGES, BATCH
    H = jax.random.normal(k_h, (B, n, d), jnp.float32)
    E = jax.random.normal(k_e, (B, m, d), jnp.float32)
    ht = jax.random.randint(k_ht, (B, m, 2), 0, n, jnp.int32)

    # Deterministic synthetic parameters (shapes match nn.Linear(4d, d) / nn.LayerNorm(d)).
    params = {
        "Wf": 0.05 * jax.random.normal(k_wf, (d, 4 * d), jnp.float32),
        "bf": 0.05 * jax.random.normal(k_bf, (d,), jnp.float32),
        "Wb": 0.05 * jax.random.normal(k_wb, (d, 4 * d), jnp.float32),
        "bb": 0.05 * jax.random.normal(k_bb, (d,), jnp.float32),
        "gamma": 1.0 + 0.05 * jax.random.normal(k_g, (d,), jnp.float32),
        "beta": 0.05 * jax.random.normal(k_b, (d,), jnp.float32),
    }

    out = message_passing_forward(H, E, ht, params)
    out = jax.block_until_ready(out)

    ref = jax.vmap(lambda h, e, t: _reference_forward_single(h, e, t, params))(H, E, ht)
    assert out.shape == (B, n, d)
    err = jnp.max(jnp.abs(out - ref))
    assert jnp.allclose(out, ref, atol=1e-4, rtol=1e-4), f"max abs err {err}"
    print("KERNEL_OK")
</pallas_src>

<mosaic_0001>
module attributes {stable_mosaic.version = 11 : i64} {
  func.func @_message_passing_kernel(%arg0: memref<64x32xf32, #tpu.memory_space<vmem>>, %arg1: memref<32x32xf32, #tpu.memory_space<vmem>>, %arg2: memref<64x1xi32, #tpu.memory_space<vmem>>, %arg3: memref<1x64xi32, #tpu.memory_space<vmem>>, %arg4: memref<256x32xf32, #tpu.memory_space<vmem>>, %arg5: memref<4x32xf32, #tpu.memory_space<vmem>>, %arg6: memref<64x32xf32, #tpu.memory_space<vmem>>) attributes {dimension_semantics = [], scalar_prefetch = 0 : i64, scratch_operands = 0 : i64, tpu.core_type = #tpu.core_type<tc>} {
    %c0 = arith.constant 0 : index
    %c0_0 = arith.constant 0 : index
    %0 = vector.load %arg0[%c0, %c0_0] : memref<64x32xf32, #tpu.memory_space<vmem>>, vector<64x32xf32>
    %c0_1 = arith.constant 0 : index
    %c0_2 = arith.constant 0 : index
    %1 = vector.load %arg1[%c0_1, %c0_2] : memref<32x32xf32, #tpu.memory_space<vmem>>, vector<32x32xf32>
    %c0_3 = arith.constant 0 : index
    %c0_4 = arith.constant 0 : index
    %2 = vector.load %arg2[%c0_3, %c0_4] : memref<64x1xi32, #tpu.memory_space<vmem>>, vector<64x1xi32>
    %c0_5 = arith.constant 0 : index
    %c0_6 = arith.constant 0 : index
    %3 = vector.load %arg3[%c0_5, %c0_6] : memref<1x64xi32, #tpu.memory_space<vmem>>, vector<1x64xi32>
    %c0_7 = arith.constant 0 : index
    %c0_8 = arith.constant 0 : index
    %4 = vector.load %arg4[%c0_7, %c0_8] : memref<256x32xf32, #tpu.memory_space<vmem>>, vector<256x32xf32>
    %c0_9 = arith.constant 0 : index
    %c0_10 = arith.constant 0 : index
    %5 = vector.load %arg5[%c0_9, %c0_10] : memref<4x32xf32, #tpu.memory_space<vmem>>, vector<1x32xf32>
    %c1 = arith.constant 1 : index
    %c0_11 = arith.constant 0 : index
    %6 = vector.load %arg5[%c1, %c0_11] : memref<4x32xf32, #tpu.memory_space<vmem>>, vector<1x32xf32>
    %c2 = arith.constant 2 : index
    %c0_12 = arith.constant 0 : index
    %7 = vector.load %arg5[%c2, %c0_12] : memref<4x32xf32, #tpu.memory_space<vmem>>, vector<1x32xf32>
    %c3 = arith.constant 3 : index
    %c0_13 = arith.constant 0 : index
    %8 = vector.load %arg5[%c3, %c0_13] : memref<4x32xf32, #tpu.memory_space<vmem>>, vector<1x32xf32>
    %9 = tpu.iota {dimensions = array<i32: 1>} : vector<64x64xi32>
    %10 = vector.broadcast %2 : vector<64x1xi32> to vector<64x64xi32>
    %11 = arith.cmpi eq, %9, %10 : vector<64x64xi32>
    %12 = arith.extui %11 : vector<64x64xi1> to vector<64x64xi32>
    %13 = arith.sitofp %12 : vector<64x64xi32> to vector<64x64xf32>
    %cst = arith.constant dense<0.000000e+00> : vector<64x32xf32>
    %14 = tpu.matmul %13, %0, %cst {dimension_numbers = #tpu.dot_dimension_numbers<[1], [0], [0], [1], [0, 0, 1, 1], [], []>} : vector<64x64xf32>, vector<64x32xf32>, vector<64x32xf32> -> vector<64x32xf32>
    %15 = tpu.concatenate %1, %1 in 0 : vector<32x32xf32>, vector<32x32xf32> -> vector<64x32xf32>
    %16 = arith.addf %14, %15 : vector<64x32xf32>
    %17 = arith.mulf %14, %15 : vector<64x32xf32>
    %18 = tpu.concatenate %14, %15, %16, %17 in 1 : vector<64x32xf32>, vector<64x32xf32>, vector<64x32xf32>, vector<64x32xf32> -> vector<64x128xf32>
    %19 = tpu.iota {dimensions = array<i32: 0>} : vector<64x1xi32>
    %c32_i32 = arith.constant 32 : i32
    %20 = vector.broadcast %c32_i32 : i32 to vector<64x1xi32>
    %21 = arith.cmpi slt, %19, %20 : vector<64x1xi32>
    %cst_14 = arith.constant 0.000000e+00 : f32
    %22 = vector.shape_cast %21 : vector<64x1xi1> to vector<64x1xi1>
    %23 = vector.broadcast %22 : vector<64x1xi1> to vector<64x128xi1>
    %24 = vector.broadcast %cst_14 : f32 to vector<64x128xf32>
    %25 = arith.select %23, %18, %24 : vector<64x128xi1>, vector<64x128xf32>
    %cst_15 = arith.constant 0.000000e+00 : f32
    %26 = vector.shape_cast %21 : vector<64x1xi1> to vector<64x1xi1>
    %27 = vector.broadcast %26 : vector<64x1xi1> to vector<64x128xi1>
    %28 = vector.broadcast %cst_15 : f32 to vector<64x128xf32>
    %29 = arith.select %27, %28, %18 : vector<64x128xi1>, vector<64x128xf32>
    %30 = tpu.concatenate %25, %29 in 1 : vector<64x128xf32>, vector<64x128xf32> -> vector<64x256xf32>
    %31 = vector.shape_cast %21 : vector<64x1xi1> to vector<64x1xi1>
    %32 = vector.broadcast %31 : vector<64x1xi1> to vector<64x32xi1>
    %33 = vector.shape_cast %5 : vector<1x32xf32> to vector<1x32xf32>
    %34 = vector.broadcast %33 : vector<1x32xf32> to vector<64x32xf32>
    %35 = vector.shape_cast %6 : vector<1x32xf32> to vector<1x32xf32>
    %36 = vector.broadcast %35 : vector<1x32xf32> to vector<64x32xf32>
    %37 = arith.select %32, %34, %36 : vector<64x32xi1>, vector<64x32xf32>
    %cst_16 = arith.constant dense<0.000000e+00> : vector<64x32xf32>
    %38 = tpu.matmul %30, %4, %cst_16 {dimension_numbers = #tpu.dot_dimension_numbers<[1], [0], [0], [1], [0, 0, 1, 1], [], []>} : vector<64x256xf32>, vector<256x32xf32>, vector<64x32xf32> -> vector<64x32xf32>
    %39 = arith.addf %38, %37 : vector<64x32xf32>
    %40 = tpu.iota {dimensions = array<i32: 0>} : vector<64x64xi32>
    %41 = vector.broadcast %3 : vector<1x64xi32> to vector<64x64xi32>
    %42 = arith.cmpi eq, %40, %41 : vector<64x64xi32>
    %43 = arith.extui %42 : vector<64x64xi1> to vector<64x64xi32>
    %44 = arith.sitofp %43 : vector<64x64xi32> to vector<64x64xf32>
    %cst_17 = arith.constant 1.000000e+00 : f32
    %45 = vector.broadcast %cst_17 : f32 to vector<64x1xf32>
    %46 = tpu.concatenate %39, %45 in 1 : vector<64x32xf32>, vector<64x1xf32> -> vector<64x33xf32>
    %cst_18 = arith.constant dense<0.000000e+00> : vector<64x33xf32>
    %47 = tpu.matmul %44, %46, %cst_18 {dimension_numbers = #tpu.dot_dimension_numbers<[1], [0], [0], [1], [0, 0, 1, 1], [], []>} : vector<64x64xf32>, vector<64x33xf32>, vector<64x33xf32> -> vector<64x33xf32>
    %48 = vector.extract_strided_slice %47 {offsets = [0, 0], sizes = [64, 32], strides = [1, 1]} : vector<64x33xf32> to vector<64x32xf32>
    %49 = vector.extract_strided_slice %47 {offsets = [0, 32], sizes = [64, 1], strides = [1, 1]} : vector<64x33xf32> to vector<64x1xf32>
    %cst_19 = arith.constant 0.000000e+00 : f32
    %50 = vector.broadcast %cst_19 : f32 to vector<64x1xf32>
    %51 = arith.cmpf ogt, %49, %50 : vector<64x1xf32>
    %cst_20 = arith.constant 1.000000e+00 : f32
    %52 = vector.broadcast %cst_20 : f32 to vector<64x1xf32>
    %53 = arith.maximumf %49, %52 : vector<64x1xf32>
    %54 = vector.broadcast %53 : vector<64x1xf32> to vector<64x32xf32>
    %55 = arith.divf %48, %54 : vector<64x32xf32>
    %cst_21 = arith.constant 0.000000e+00 : f32
    %56 = vector.shape_cast %51 : vector<64x1xi1> to vector<64x1xi1>
    %57 = vector.broadcast %56 : vector<64x1xi1> to vector<64x32xi1>
    %58 = vector.broadcast %cst_21 : f32 to vector<64x32xf32>
    %59 = arith.select %57, %55, %58 : vector<64x32xi1>, vector<64x32xf32>
    %cst_22 = arith.constant 0.000000e+00 : f32
    %60 = vector.broadcast %cst_22 : f32 to vector<64x32xf32>
    %61 = arith.cmpf oge, %59, %60 : vector<64x32xf32>
    %cst_23 = arith.constant 0.00999999977 : f32
    %62 = vector.broadcast %cst_23 : f32 to vector<64x32xf32>
    %63 = arith.mulf %62, %59 : vector<64x32xf32>
    %64 = arith.select %61, %59, %63 : vector<64x32xi1>, vector<64x32xf32>
    %65 = arith.addf %64, %0 : vector<64x32xf32>
    %cst_24 = arith.constant dense<0.000000e+00> : vector<64xf32>
    %66 = vector.multi_reduction <add>, %65, %cst_24 [1] : vector<64x32xf32> to vector<64xf32>
    %67 = vector.shape_cast %66 : vector<64xf32> to vector<64x1xf32>
    %cst_25 = arith.constant 3.125000e-02 : f32
    %68 = vector.broadcast %cst_25 : f32 to vector<64x1xf32>
    %69 = arith.mulf %67, %68 : vector<64x1xf32>
    %70 = arith.mulf %65, %65 : vector<64x32xf32>
    %cst_26 = arith.constant dense<0.000000e+00> : vector<64xf32>
    %71 = vector.multi_reduction <add>, %70, %cst_26 [1] : vector<64x32xf32> to vector<64xf32>
    %72 = vector.shape_cast %71 : vector<64xf32> to vector<64x1xf32>
    %cst_27 = arith.constant 3.125000e-02 : f32
    %73 = vector.broadcast %cst_27 : f32 to vector<64x1xf32>
    %74 = arith.mulf %72, %73 : vector<64x1xf32>
    %75 = arith.mulf %69, %69 : vector<64x1xf32>
    %76 = arith.subf %74, %75 : vector<64x1xf32>
    %77 = vector.broadcast %69 : vector<64x1xf32> to vector<64x32xf32>
    %78 = arith.subf %65, %77 : vector<64x32xf32>
    %cst_28 = arith.constant 9.99999974E-6 : f32
    %79 = vector.broadcast %cst_28 : f32 to vector<64x1xf32>
    %80 = arith.addf %76, %79 : vector<64x1xf32>
    %81 = math.rsqrt %80 : vector<64x1xf32>
    %82 = vector.broadcast %81 : vector<64x1xf32> to vector<64x32xf32>
    %83 = arith.mulf %78, %82 : vector<64x32xf32>
    %84 = vector.broadcast %7 : vector<1x32xf32> to vector<64x32xf32>
    %85 = arith.mulf %83, %84 : vector<64x32xf32>
    %86 = vector.broadcast %8 : vector<1x32xf32> to vector<64x32xf32>
    %87 = arith.addf %85, %86 : vector<64x32xf32>
    %c0_29 = arith.constant 0 : index
    %c0_30 = arith.constant 0 : index
    %88 = vector.load %arg6[%c0_29, %c0_30] : memref<64x32xf32, #tpu.memory_space<vmem>>, vector<64x32xf32>
    tpu.vector_store %arg6[%c0_29, %c0_30], %87 {strides = array<i32>} : memref<64x32xf32, #tpu.memory_space<vmem>>, vector<64x32xf32>,
    return
  }
}

</mosaic_0001>

<llo_original>
// kernel: message_passing_forward.1
$region0: #{message_passing_forward.1}
  #allocation0 [shape = 'u32[]', space=smem, size = 0x4, offset = 0x4, fixed_abs, tag = 'smem constant byte address 0x4 - core index']
  #allocation1 [shape = 'u32[144,128]{1,0:T(1,128)}', space=vmem, size = 0x12000, scoped, tag = 'internal scratch']
  %s0 = inlined_call_operand.vmem [shape: f32[64,32], index: 0, kind: input, shape index: {}]
  %s1 = inlined_call_operand.vmem [shape: f32[32,32], index: 1, kind: input, shape index: {}]
  %s2 = inlined_call_operand.vmem [shape: s32[64,1], index: 2, kind: input, shape index: {}]
  %s3 = inlined_call_operand.vmem [shape: s32[1,64], index: 3, kind: input, shape index: {}]
  %s4 = inlined_call_operand.vmem [shape: f32[256,32], index: 4, kind: input, shape index: {}]
  %s5 = inlined_call_operand.vmem [shape: f32[4,32], index: 5, kind: input, shape index: {}]
  %s6 = inlined_call_operand.hbm [shape: f32[64,32], index: 6, kind: output, shape index: {}]
  %s7 = sld [smem:[#allocation0]]
  $region34: #{message_passing_forward.1} parent=0
    _
  %s9 = ssub.s32 1, %s7
  %s10 = scalar_select 0, %s9, %s7
  $region1: #{message_passing_forward.1} parent=0
    #allocation2 [shape = 'u8[32768]{0}', space=vmem, size = 0x8000, scoped, tag = 'output window, operand 0, single buffered']
    #allocation3 [shape = 's32[1]{0}', space=sflag, size = 0x4, scoped, tag = 'scoped memory for message_passing_forward.1']
    %11 = vsyncpa [#allocation3], 0
    // Predicated region
    $region2: #{message_passing_forward.1} parent=1 // pred_check
      _
    $region3: #{message_passing_forward.1} parent=1 // pred_check_branch
      %13 = sbr.rel (0) target = $region5
    $region4: #{message_passing_forward.1} parent=1 // pred_region
      _
    $region5: #{message_passing_forward.1} parent=1 // pred_fallthru
      _
    // Predicated region
    $region6: #{message_passing_forward.1} parent=1 // pred_check
      _
    $region7: #{message_passing_forward.1} parent=1 // pred_check_branch
      %15 = sbr.rel (0) target = $region9
    $region8: #{message_passing_forward.1} parent=1 // pred_region
      _
    $region9: #{message_passing_forward.1} parent=1 // pred_fallthru
      _
    // Predicated region
    $region10: #{message_passing_forward.1} parent=1 // pred_check
      _
    $region11: #{message_passing_forward.1} parent=1 // pred_check_branch
      %17 = sbr.rel (0) target = $region13
    $region12: #{message_passing_forward.1} parent=1 // pred_region
      _
    $region13: #{message_passing_forward.1} parent=1 // pred_fallthru
      _
    // Predicated region
    $region14: #{message_passing_forward.1} parent=1 // pred_check
      _
    $region15: #{message_passing_forward.1} parent=1 // pred_check_branch
      %19 = sbr.rel (0) target = $region17
    $region16: #{message_passing_forward.1} parent=1 // pred_region
      _
    $region17: #{message_passing_forward.1} parent=1 // pred_fallthru
      _
    // Predicated region
    $region18: #{message_passing_forward.1} parent=1 // pred_check
      _
    $region19: #{message_passing_forward.1} parent=1 // pred_check_branch
      %21 = sbr.rel (0) target = $region21
    $region20: #{message_passing_forward.1} parent=1 // pred_region
      _
    $region21: #{message_passing_forward.1} parent=1 // pred_fallthru
      _
    // Predicated region
    $region22: #{message_passing_forward.1} parent=1 // pred_check
      _
    $region23: #{message_passing_forward.1} parent=1 // pred_check_branch
      %23 = sbr.rel (0) target = $region25
    $region24: #{message_passing_forward.1} parent=1 // pred_region
      _
    $region25: #{message_passing_forward.1} parent=1 // pred_fallthru
      _
    %v24 = vld [vmem:[%s0] sm:$0xff]
    %v25 = vld [vmem:[%s0 + $0x8] sm:$0xff]
    %v26 = vld [vmem:[%s0 + $0x10] sm:$0xff]
    %v27 = vld [vmem:[%s0 + $0x18] sm:$0xff]
    %v28 = vld [vmem:[%s0 + $0x20] sm:$0xff]
    %v29 = vld [vmem:[%s0 + $0x28] sm:$0xff]
    %v30 = vld [vmem:[%s0 + $0x30] sm:$0xff]
    %v31 = vld [vmem:[%s0 + $0x38] sm:$0xff]
    %v32 = vld [vmem:[%s1] sm:$0xff]
    %v33 = vld [vmem:[%s1 + $0x8] sm:$0xff]
    %v34 = vld [vmem:[%s1 + $0x10] sm:$0xff]
    %v35 = vld [vmem:[%s1 + $0x18] sm:$0xff]
    %v36 = vld [vmem:[%s2] sm:$0xff]
    %v37 = vld [vmem:[%s2 + $0x8] sm:$0xff]
    %v38 = vld [vmem:[%s2 + $0x10] sm:$0xff]
    %v39 = vld [vmem:[%s2 + $0x18] sm:$0xff]
    %v40 = vld [vmem:[%s2 + $0x20] sm:$0xff]
    %v41 = vld [vmem:[%s2 + $0x28] sm:$0xff]
    %v42 = vld [vmem:[%s2 + $0x30] sm:$0xff]
    %v43 = vld [vmem:[%s2 + $0x38] sm:$0xff]
    %v44 = vld [vmem:[%s3] sm:$0x1]
    %v45 = vld [vmem:[%s4] sm:$0xff]
    %v46 = vld [vmem:[%s4 + $0x8] sm:$0xff]
    %v47 = vld [vmem:[%s4 + $0x10] sm:$0xff]
    %v48 = vld [vmem:[%s4 + $0x18] sm:$0xff]
    %v49 = vld [vmem:[%s4 + $0x20] sm:$0xff]
    %v50 = vld [vmem:[%s4 + $0x28] sm:$0xff]
    %v51 = vld [vmem:[%s4 + $0x30] sm:$0xff]
    %v52 = vld [vmem:[%s4 + $0x38] sm:$0xff]
    %v53 = vld [vmem:[%s4 + $0x40] sm:$0xff]
    %v54 = vld [vmem:[%s4 + $0x48] sm:$0xff]
    %v55 = vld [vmem:[%s4 + $0x50] sm:$0xff]
    %v56 = vld [vmem:[%s4 + $0x58] sm:$0xff]
    %v57 = vld [vmem:[%s4 + $0x60] sm:$0xff]
    %v58 = vld [vmem:[%s4 + $0x68] sm:$0xff]
    %v59 = vld [vmem:[%s4 + $0x70] sm:$0xff]
    %v60 = vld [vmem:[%s4 + $0x78] sm:$0xff]
    %v61 = vld [vmem:[%s4 + $0x80] sm:$0xff]
    %v62 = vld [vmem:[%s4 + $0x88] sm:$0xff]
    %v63 = vld [vmem:[%s4 + $0x90] sm:$0xff]
    %v64 = vld [vmem:[%s4 + $0x98] sm:$0xff]
    %v65 = vld [vmem:[%s4 + $0xa0] sm:$0xff]
    %v66 = vld [vmem:[%s4 + $0xa8] sm:$0xff]
    %v67 = vld [vmem:[%s4 + $0xb0] sm:$0xff]
    %v68 = vld [vmem:[%s4 + $0xb8] sm:$0xff]
    %v69 = vld [vmem:[%s4 + $0xc0] sm:$0xff]
    %v70 = vld [vmem:[%s4 + $0xc8] sm:$0xff]
    %v71 = vld [vmem:[%s4 + $0xd0] sm:$0xff]
    %v72 = vld [vmem:[%s4 + $0xd8] sm:$0xff]
    %v73 = vld [vmem:[%s4 + $0xe0] sm:$0xff]
    %v74 = vld [vmem:[%s4 + $0xe8] sm:$0xff]
    %v75 = vld [vmem:[%s4 + $0xf0] sm:$0xff]
    %v76 = vld [vmem:[%s4 + $0xf8] sm:$0xff]
    %v77 = vld [vmem:[%s5] sm:$0x1]
    %v78 = vld [vmem:[%s5 + $0x1] sm:$0x1]
    %v79 = vld [vmem:[%s5 + $0x2] sm:$0x1]
    %v80 = vld [vmem:[%s5 + $0x3] sm:$0x1]
    %v81 = vlaneseq
    %v82 = vand.u32 %v81, 127
    %83 = vset.pattern.permute.xlu0 0
    %84 = vperm.xlu0 %83, %v36
    %v85 = vpop.permute.xlu0 %84
    %86 = vset.pattern.permute.xlu0 0
    %87 = vperm.xlu0 %86, %v37
    %v88 = vpop.permute.xlu0 %87
    %89 = vset.pattern.permute.xlu0 0
    %90 = vperm.xlu0 %89, %v38
    %v91 = vpop.permute.xlu0 %90
    %92 = vset.pattern.permute.xlu0 0
    %93 = vperm.xlu0 %92, %v39
    %v94 = vpop.permute.xlu0 %93
    %95 = vset.pattern.permute.xlu0 0
    %96 = vperm.xlu0 %95, %v40
    %v97 = vpop.permute.xlu0 %96
    %98 = vset.pattern.permute.xlu0 0
    %99 = vperm.xlu0 %98, %v41
    %v100 = vpop.permute.xlu0 %99
    %101 = vset.pattern.permute.xlu0 0
    %102 = vperm.xlu0 %101, %v42
    %v103 = vpop.permute.xlu0 %102
    %104 = vset.pattern.permute.xlu0 0
    %105 = vperm.xlu0 %104, %v43
    %v106 = vpop.permute.xlu0 %105
    %vm107 = vcmp.eq.s32.totalorder %v82, %v85
    %vm108 = vcmp.eq.s32.totalorder %v82, %v88
    %vm109 = vcmp.eq.s32.totalorder %v82, %v91
    %vm110 = vcmp.eq.s32.totalorder %v82, %v94
    %vm111 = vcmp.eq.s32.totalorder %v82, %v97
    %vm112 = vcmp.eq.s32.totalorder %v82, %v100
    %vm113 = vcmp.eq.s32.totalorder %v82, %v103
    %vm114 = vcmp.eq.s32.totalorder %v82, %v106
    %v115 = vsel %vm107, 1, 0
    %v116 = vsel %vm108, 1, 0
    %v117 = vsel %vm109, 1, 0
    %v118 = vsel %vm110, 1, 0
    %v119 = vsel %vm111, 1, 0
    %v120 = vsel %vm112, 1, 0
    %v121 = vsel %vm113, 1, 0
    %v122 = vsel %vm114, 1, 0
    %v123 = vcvt.s32.f32 %v115
    %v124 = vcvt.s32.f32 %v116
    %v125 = vcvt.s32.f32 %v117
    %v126 = vcvt.s32.f32 %v118
    %v127 = vcvt.s32.f32 %v119
    %v128 = vcvt.s32.f32 %v120
    %v129 = vcvt.s32.f32 %v121
    %v130 = vcvt.s32.f32 %v122
    %vm131 = vcmask 523264
    %v133 = vsel %vm131, %v123, 0
    %v136 = vsel %vm131, %v124, 0
    %v139 = vsel %vm131, %v125, 0
    %v142 = vsel %vm131, %v126, 0
    %v145 = vsel %vm131, %v127, 0
    %v148 = vsel %vm131, %v128, 0
    %v151 = vsel %vm131, %v129, 0
    %v154 = vsel %vm131, %v130, 0
    %156 = vmatprep.subr.mxu0 0.0
    %157 = vmatpush1.msra.mxu0 0.0
    %158 = vmatprep.subr.mxu0 0.0
    %159 = vmatpush1.msra.mxu0 0.0
    %160 = vmatprep.subr.mxu0 0.0
    %161 = vmatpush1.msra.mxu0 0.0
    %162 = vmatprep.subr.mxu0 0.0
    %163 = vmatpush1.msra.mxu0 0.0
    %164 = vmatprep.subr.mxu0 0.0
    %165 = vmatpush1.msra.mxu0 0.0
    %166 = vmatprep.subr.mxu0 0.0
    %167 = vmatpush1.msra.mxu0 0.0
    %168 = vmatprep.subr.mxu0 0.0
    %169 = vmatpush1.msra.mxu0 0.0
    %170 = vmatprep.subr.mxu0 0.0
    %171 = vmatpush1.msra.mxu0 0.0
    %172 = vmatprep.subr.mxu0 0.0
    %173 = vmatpush1.msra.mxu0 %v31
    %174 = vmatprep.subr.mxu0 0.0
    %175 = vmatpush1.msra.mxu0 %v30
    %176 = vmatprep.subr.mxu0 0.0
    %177 = vmatpush1.msra.mxu0 %v29
    %178 = vmatprep.subr.mxu0 0.0
    %179 = vmatpush1.msra.mxu0 %v28
    %180 = vmatprep.subr.mxu0 0.0
    %181 = vmatpush1.msra.mxu0 %v27
    %182 = vmatprep.subr.mxu0 0.0
    %183 = vmatpush1.msra.mxu0 %v26
    %184 = vmatprep.subr.mxu0 0.0
    %185 = vmatpush1.msra.mxu0 %v25
    %186 = vmatprep.subr.mxu0 0.0
    %187 = vmatpush1.msra.mxu0 %v24
    %188 = vmatprep.subr.mxu0 0.0
    %189 = vmatpush2.msra.mxu0 0.0
    %190 = vmatprep.subr.mxu0 0.0
    %191 = vmatpush2.msra.mxu0 0.0
    %192 = vmatprep.subr.mxu0 0.0
    %193 = vmatpush2.msra.mxu0 0.0
    %194 = vmatprep.subr.mxu0 0.0
    %195 = vmatpush2.msra.mxu0 0.0
    %196 = vmatprep.subr.mxu0 0.0
    %197 = vmatpush2.msra.mxu0 0.0
    %198 = vmatprep.subr.mxu0 0.0
    %199 = vmatpush2.msra.mxu0 0.0
    %200 = vmatprep.subr.mxu0 0.0
    %201 = vmatpush2.msra.mxu0 0.0
    %202 = vmatprep.subr.mxu0 0.0
    %203 = vmatpush2.msra.mxu0 0.0
    %204 = vmatprep.subr.mxu0 0.0
    %205 = vmatpush2.msra.mxu0 0.0
    %206 = vmatprep.subr.mxu0 0.0
    %207 = vmatpush2.msra.mxu0 0.0
    %208 = vmatprep.subr.mxu0 0.0
    %209 = vmatpush2.msra.mxu0 0.0
    %210 = vmatprep.subr.mxu0 0.0
    %211 = vmatpush2.msra.mxu0 0.0
    %212 = vmatprep.subr.mxu0 0.0
    %213 = vmatpush2.msra.mxu0 0.0
    %214 = vmatprep.subr.mxu0 0.0
    %215 = vmatpush2.msra.mxu0 0.0
    %216 = vmatprep.subr.mxu0 0.0
    %217 = vmatpush2.msra.mxu0 0.0
    %218 = vmatprep.subr.mxu0 0.0
    %219 = vmatpush2.msra.mxu0 0.0
    %220 = vmatprep.mubr.f32.mxu0 0.0
    %221 = vmatmul.mubr.f32.gmra.mxu0 %v133
    %v222 = vpop.f32.mrf.mxu0
    %v223 = vadd.f32 0.0, %v222
    %v224 = vpop.f32.mrf.mxu0
    %225 = vmatprep.mubr.f32.mxu0 0.0
    %226 = vmatmul.mubr.f32.gmra.mxu0 %v136
    %v227 = vpop.f32.mrf.mxu0
    %v228 = vadd.f32 0.0, %v227
    %v229 = vpop.f32.mrf.mxu0
    %230 = vmatprep.mubr.f32.mxu0 0.0
    %231 = vmatmul.mubr.f32.gmra.mxu0 %v139
    %v232 = vpop.f32.mrf.mxu0
    %v233 = vadd.f32 0.0, %v232
    %v234 = vpop.f32.mrf.mxu0
    %235 = vmatprep.mubr.f32.mxu0 0.0
    %236 = vmatmul.mubr.f32.gmra.mxu0 %v142
    %v237 = vpop.f32.mrf.mxu0
    %v238 = vadd.f32 0.0, %v237
    %v239 = vpop.f32.mrf.mxu0
    %240 = vmatprep.mubr.f32.mxu0 0.0
    %241 = vmatmul.mubr.f32.gmra.mxu0 %v145
    %v242 = vpop.f32.mrf.mxu0
    %v243 = vadd.f32 0.0, %v242
    %v244 = vpop.f32.mrf.mxu0
    %245 = vmatprep.mubr.f32.mxu0 0.0
    %246 = vmatmul.mubr.f32.gmra.mxu0 %v148
    %v247 = vpop.f32.mrf.mxu0
    %v248 = vadd.f32 0.0, %v247
    %v249 = vpop.f32.mrf.mxu0
    %250 = vmatprep.mubr.f32.mxu0 0.0
    %251 = vmatmul.mubr.f32.gmra.mxu0 %v151
    %v252 = vpop.f32.mrf.mxu0
    %v253 = vadd.f32 0.0, %v252
    %v254 = vpop.f32.mrf.mxu0
    %255 = vmatprep.mubr.f32.mxu0 0.0
    %256 = vmatmul.mubr.f32.gmra.mxu0 %v154
    %v257 = vpop.f32.mrf.mxu0
    %v258 = vadd.f32 0.0, %v257
    %v259 = vpop.f32.mrf.mxu0
    %260 = vdwg.mxu0
    %v261 = vadd.f32 %v223, %v32
    %v262 = vadd.f32 %v228, %v33
    %v263 = vadd.f32 %v233, %v34
    %v264 = vadd.f32 %v238, %v35
    %v265 = vadd.f32 %v243, %v32
    %v266 = vadd.f32 %v248, %v33
    %v267 = vadd.f32 %v253, %v34
    %v268 = vadd.f32 %v258, %v35
    %v269 = vmul.f32 %v223, %v32
    %v270 = vmul.f32 %v228, %v33
    %v271 = vmul.f32 %v233, %v34
    %v272 = vmul.f32 %v238, %v35
    %v273 = vmul.f32 %v243, %v32
    %v274 = vmul.f32 %v248, %v33
    %v275 = vmul.f32 %v253, %v34
    %v276 = vmul.f32 %v258, %v35
    %281 = vrot.lane.b32.xlu0 %v32, 32
    %v282 = vpop.permute.xlu0 %281
    %283 = vrot.lane.b32.xlu0 %v33, 32
    %v284 = vpop.permute.xlu0 %283
    %285 = vrot.lane.b32.xlu0 %v34, 32
    %v286 = vpop.permute.xlu0 %285
    %287 = vrot.lane.b32.xlu0 %v35, 32
    %v288 = vpop.permute.xlu0 %287
    %301 = vrot.lane.b32.xlu0 %v261, 64
    %v302 = vpop.permute.xlu0 %301
    %303 = vrot.lane.b32.xlu0 %v262, 64
    %v304 = vpop.permute.xlu0 %303
    %305 = vrot.lane.b32.xlu0 %v263, 64
    %v306 = vpop.permute.xlu0 %305
    %307 = vrot.lane.b32.xlu0 %v264, 64
    %v308 = vpop.permute.xlu0 %307
    %309 = vrot.lane.b32.xlu0 %v265, 64
    %v310 = vpop.permute.xlu0 %309
    %311 = vrot.lane.b32.xlu0 %v266, 64
    %v312 = vpop.permute.xlu0 %311
    %313 = vrot.lane.b32.xlu0 %v267, 64
    %v314 = vpop.permute.xlu0 %313
    %315 = vrot.lane.b32.xlu0 %v268, 64
    %v316 = vpop.permute.xlu0 %315
    %333 = vrot.lane.b32.xlu0 %v269, 96
    %v334 = vpop.permute.xlu0 %333
    %335 = vrot.lane.b32.xlu0 %v270, 96
    %v336 = vpop.permute.xlu0 %335
    %337 = vrot.lane.b32.xlu0 %v271, 96
    %v338 = vpop.permute.xlu0 %337
    %339 = vrot.lane.b32.xlu0 %v272, 96
    %v340 = vpop.permute.xlu0 %339
    %341 = vrot.lane.b32.xlu0 %v273, 96
    %v342 = vpop.permute.xlu0 %341
    %343 = vrot.lane.b32.xlu0 %v274, 96
    %v344 = vpop.permute.xlu0 %343
    %345 = vrot.lane.b32.xlu0 %v275, 96
    %v346 = vpop.permute.xlu0 %345
    %347 = vrot.lane.b32.xlu0 %v276, 96
    %v348 = vpop.permute.xlu0 %347
    %vm357 = vcmask 261120
    %v358 = vsel %vm357, %v223, %v282
    %v359 = vsel %vm357, %v228, %v284
    %v360 = vsel %vm357, %v233, %v286
    %v361 = vsel %vm357, %v238, %v288
    %v362 = vsel %vm357, %v243, %v282
    %v363 = vsel %vm357, %v248, %v284
    %v364 = vsel %vm357, %v253, %v286
    %v365 = vsel %vm357, %v258, %v288
    %v366 = vsel %vm131, %v358, %v302
    %v367 = vsel %vm131, %v359, %v304
    %v368 = vsel %vm131, %v360, %v306
    %v369 = vsel %vm131, %v361, %v308
    %v370 = vsel %vm131, %v362, %v310
    %v371 = vsel %vm131, %v363, %v312
    %v372 = vsel %vm131, %v364, %v314
    %v373 = vsel %vm131, %v365, %v316
    %vm374 = vcmask 785408
    %v375 = vsel %vm374, %v366, %v334
    %v376 = vsel %vm374, %v367, %v336
    %v377 = vsel %vm374, %v368, %v338
    %v378 = vsel %vm374, %v369, %v340
    %v379 = vsel %vm374, %v370, %v342
    %v380 = vsel %vm374, %v371, %v344
    %v381 = vsel %vm374, %v372, %v346
    %v382 = vsel %vm374, %v373, %v348
    %v383 = vlaneseq
    %v384 = vshrl.u32 %v383, 7
    %v385 = vadd.s32 %v384, 8
    %v386 = vadd.s32 %v384, 16
    %v387 = vadd.s32 %v384, 24
    %v388 = vadd.s32 %v384, 32
    %v389 = vadd.s32 %v384, 40
    %v390 = vadd.s32 %v384, 48
    %v391 = vadd.s32 %v384, 56
    %vm392 = vcmp.lt.s32.totalorder %v384, 32
    %vm393 = vcmp.lt.s32.totalorder %v385, 32
    %vm394 = vcmp.lt.s32.totalorder %v386, 32
    %vm395 = vcmp.lt.s32.totalorder %v387, 32
    %vm396 = vcmp.lt.s32.totalorder %v388, 32
    %vm397 = vcmp.lt.s32.totalorder %v389, 32
    %vm398 = vcmp.lt.s32.totalorder %v390, 32
    %vm399 = vcmp.lt.s32.totalorder %v391, 32
    %v400 = vsel %vm392, 1, 0
    %v401 = vsel %vm393, 1, 0
    %v402 = vsel %vm394, 1, 0
    %v403 = vsel %vm395, 1, 0
    %v404 = vsel %vm396, 1, 0
    %v405 = vsel %vm397, 1, 0
    %v406 = vsel %vm398, 1, 0
    %v407 = vsel %vm399, 1, 0
    %vm408 = vcmp.eq.s32.totalorder %v400, 1
    %vm409 = vcmp.eq.s32.totalorder %v401, 1
    %vm410 = vcmp.eq.s32.totalorder %v402, 1
    %vm411 = vcmp.eq.s32.totalorder %v403, 1
    %vm412 = vcmp.eq.s32.totalorder %v404, 1
    %vm413 = vcmp.eq.s32.totalorder %v405, 1
    %vm414 = vcmp.eq.s32.totalorder %v406, 1
    %vm415 = vcmp.eq.s32.totalorder %v407, 1
    %v416 = vsel %vm408, %v375, 0.0
    %v417 = vsel %vm409, %v376, 0.0
    %v418 = vsel %vm410, %v377, 0.0
    %v419 = vsel %vm411, %v378, 0.0
    %v420 = vsel %vm412, %v379, 0.0
    %v421 = vsel %vm413, %v380, 0.0
    %v422 = vsel %vm414, %v381, 0.0
    %v423 = vsel %vm415, %v382, 0.0
    %v424 = vsel %vm408, 0.0, %v375
    %v425 = vsel %vm409, 0.0, %v376
    %v426 = vsel %vm410, 0.0, %v377
    %v427 = vsel %vm411, 0.0, %v378
    %v428 = vsel %vm412, 0.0, %v379
    %v429 = vsel %vm413, 0.0, %v380
    %v430 = vsel %vm414, 0.0, %v381
    %v431 = vsel %vm415, 0.0, %v382
    %v432 = vlaneseq
    %v433 = vshrl.u32 %v432, 7
    %v434 = vsub.s32 0, %v433
    %v435 = vrot.slane %v77, %v434
    %v436 = vlaneseq
    %v437 = vshrl.u32 %v436, 7
    %v438 = vsub.s32 0, %v437
    %v439 = vrot.slane %v78, %v438
    %v440 = vsel %vm408, %v435, %v439
    %v441 = vsel %vm409, %v435, %v439
    %v442 = vsel %vm410, %v435, %v439
    %v443 = vsel %vm411, %v435, %v439
    %v444 = vsel %vm412, %v435, %v439
    %v445 = vsel %vm413, %v435, %v439
    %v446 = vsel %vm414, %v435, %v439
    %v447 = vsel %vm415, %v435, %v439
    %448 = vmatprep.subr.mxu0 0.0
    %449 = vmatpush1.msra.mxu0 %v60
    %450 = vmatprep.subr.mxu0 0.0
    %451 = vmatpush1.msra.mxu0 %v59
    %452 = vmatprep.subr.mxu0 0.0
    %453 = vmatpush1.msra.mxu0 %v58
    %454 = vmatprep.subr.mxu0 0.0
    %455 = vmatpush1.msra.mxu0 %v57
    %456 = vmatprep.subr.mxu0 0.0
    %457 = vmatpush1.msra.mxu0 %v56
    %458 = vmatprep.subr.mxu0 0.0
    %459 = vmatpush1.msra.mxu0 %v55
    %460 = vmatprep.subr.mxu0 0.0
    %461 = vmatpush1.msra.mxu0 %v54
    %462 = vmatprep.subr.mxu0 0.0
    %463 = vmatpush1.msra.mxu0 %v53
    %464 = vmatprep.subr.mxu0 0.0
    %465 = vmatpush1.msra.mxu0 %v52
    %466 = vmatprep.subr.mxu0 0.0
    %467 = vmatpush1.msra.mxu0 %v51
    %468 = vmatprep.subr.mxu0 0.0
    %469 = vmatpush1.msra.mxu0 %v50
    %470 = vmatprep.subr.mxu0 0.0
    %471 = vmatpush1.msra.mxu0 %v49
    %472 = vmatprep.subr.mxu0 0.0
    %473 = vmatpush1.msra.mxu0 %v48
    %474 = vmatprep.subr.mxu0 0.0
    %475 = vmatpush1.msra.mxu0 %v47
    %476 = vmatprep.subr.mxu0 0.0
    %477 = vmatpush1.msra.mxu0 %v46
    %478 = vmatprep.subr.mxu0 0.0
    %479 = vmatpush1.msra.mxu0 %v45
    %480 = vmatprep.subr.mxu0 0.0
    %481 = vmatpush2.msra.mxu0 %v76
    %482 = vmatprep.subr.mxu0 0.0
    %483 = vmatpush2.msra.mxu0 %v75
    %484 = vmatprep.subr.mxu0 0.0
    %485 = vmatpush2.msra.mxu0 %v74
    %486 = vmatprep.subr.mxu0 0.0
    %487 = vmatpush2.msra.mxu0 %v73
    %488 = vmatprep.subr.mxu0 0.0
    %489 = vmatpush2.msra.mxu0 %v72
    %490 = vmatprep.subr.mxu0 0.0
    %491 = vmatpush2.msra.mxu0 %v71
    %492 = vmatprep.subr.mxu0 0.0
    %493 = vmatpush2.msra.mxu0 %v70
    %494 = vmatprep.subr.mxu0 0.0
    %495 = vmatpush2.msra.mxu0 %v69
    %496 = vmatprep.subr.mxu0 0.0
    %497 = vmatpush2.msra.mxu0 %v68
    %498 = vmatprep.subr.mxu0 0.0
    %499 = vmatpush2.msra.mxu0 %v67
    %500 = vmatprep.subr.mxu0 0.0
    %501 = vmatpush2.msra.mxu0 %v66
    %502 = vmatprep.subr.mxu0 0.0
    %503 = vmatpush2.msra.mxu0 %v65
    %504 = vmatprep.subr.mxu0 0.0
    %505 = vmatpush2.msra.mxu0 %v64
    %506 = vmatprep.subr.mxu0 0.0
    %507 = vmatpush2.msra.mxu0 %v63
    %508 = vmatprep.subr.mxu0 0.0
    %509 = vmatpush2.msra.mxu0 %v62
    %510 = vmatprep.subr.mxu0 0.0
    %511 = vmatpush2.msra.mxu0 %v61
    %512 = vmatprep.mubr.f32.mxu0 %v424
    %513 = vmatmul.mubr.f32.gmra.mxu0 %v416
    %v514 = vpop.f32.mrf.mxu0
    %v515 = vadd.f32 %v440, %v514
    %v516 = vpop.f32.mrf.mxu0
    %517 = vmatprep.mubr.f32.mxu0 %v425
    %518 = vmatmul.mubr.f32.gmra.mxu0 %v417
    %v519 = vpop.f32.mrf.mxu0
    %v520 = vadd.f32 %v441, %v519
    %v521 = vpop.f32.mrf.mxu0
    %522 = vmatprep.mubr.f32.mxu0 %v426
    %523 = vmatmul.mubr.f32.gmra.mxu0 %v418
    %v524 = vpop.f32.mrf.mxu0
    %v525 = vadd.f32 %v442, %v524
    %v526 = vpop.f32.mrf.mxu0
    %527 = vmatprep.mubr.f32.mxu0 %v427
    %528 = vmatmul.mubr.f32.gmra.mxu0 %v419
    %v529 = vpop.f32.mrf.mxu0
    %v530 = vadd.f32 %v443, %v529
    %v531 = vpop.f32.mrf.mxu0
    %532 = vmatprep.mubr.f32.mxu0 %v428
    %533 = vmatmul.mubr.f32.gmra.mxu0 %v420
    %v534 = vpop.f32.mrf.mxu0
    %v535 = vadd.f32 %v444, %v534
    %v536 = vpop.f32.mrf.mxu0
    %537 = vmatprep.mubr.f32.mxu0 %v429
    %538 = vmatmul.mubr.f32.gmra.mxu0 %v421
    %v539 = vpop.f32.mrf.mxu0
    %v540 = vadd.f32 %v445, %v539
    %v541 = vpop.f32.mrf.mxu0
    %542 = vmatprep.mubr.f32.mxu0 %v430
    %543 = vmatmul.mubr.f32.gmra.mxu0 %v422
    %v544 = vpop.f32.mrf.mxu0
    %v545 = vadd.f32 %v446, %v544
    %v546 = vpop.f32.mrf.mxu0
    %547 = vmatprep.mubr.f32.mxu0 %v431
    %548 = vmatmul.mubr.f32.gmra.mxu0 %v423
    %v549 = vpop.f32.mrf.mxu0
    %v550 = vadd.f32 %v447, %v549
    %v551 = vpop.f32.mrf.mxu0
    %552 = vdwg.mxu0
    %v553 = vlaneseq
    %v554 = vshrl.u32 %v553, 7
    %v555 = vsub.s32 0, %v554
    %v556 = vrot.slane %v44, %v555
    %vm557 = vcmp.eq.s32.totalorder %v384, %v556
    %vm558 = vcmp.eq.s32.totalorder %v385, %v556
    %vm559 = vcmp.eq.s32.totalorder %v386, %v556
    %vm560 = vcmp.eq.s32.totalorder %v387, %v556
    %vm561 = vcmp.eq.s32.totalorder %v388, %v556
    %vm562 = vcmp.eq.s32.totalorder %v389, %v556
    %vm563 = vcmp.eq.s32.totalorder %v390, %v556
    %vm564 = vcmp.eq.s32.totalorder %v391, %v556
    %v565 = vsel %vm557, 1, 0
    %v566 = vsel %vm558, 1, 0
    %v567 = vsel %vm559, 1, 0
    %v568 = vsel %vm560, 1, 0
    %v569 = vsel %vm561, 1, 0
    %v570 = vsel %vm562, 1, 0
    %v571 = vsel %vm563, 1, 0
    %v572 = vsel %vm564, 1, 0
    %v573 = vcvt.s32.f32 %v565
    %v574 = vcvt.s32.f32 %v566
    %v575 = vcvt.s32.f32 %v567
    %v576 = vcvt.s32.f32 %v568
    %v577 = vcvt.s32.f32 %v569
    %v578 = vcvt.s32.f32 %v570
    %v579 = vcvt.s32.f32 %v571
    %v580 = vcvt.s32.f32 %v572
    %v581 = vsel %vm357, %v515, 1.0
    %v582 = vsel %vm357, %v520, 1.0
    %v583 = vsel %vm357, %v525, 1.0
    %v584 = vsel %vm357, %v530, 1.0
    %v585 = vsel %vm357, %v535, 1.0
    %v586 = vsel %vm357, %v540, 1.0
    %v587 = vsel %vm357, %v545, 1.0
    %v588 = vsel %vm357, %v550, 1.0
    %v590 = vsel %vm131, %v573, 0
    %v593 = vsel %vm131, %v574, 0
    %v596 = vsel %vm131, %v575, 0
    %v599 = vsel %vm131, %v576, 0
    %v602 = vsel %vm131, %v577, 0
    %v605 = vsel %vm131, %v578, 0
    %v608 = vsel %vm131, %v579, 0
    %v611 = vsel %vm131, %v580, 0
    %613 = vmatprep.subr.mxu0 0.0
    %614 = vmatpush1.msra.mxu0 0.0
    %615 = vmatprep.subr.mxu0 0.0
    %616 = vmatpush1.msra.mxu0 0.0
    %617 = vmatprep.subr.mxu0 0.0
    %618 = vmatpush1.msra.mxu0 0.0
    %619 = vmatprep.subr.mxu0 0.0
    %620 = vmatpush1.msra.mxu0 0.0
    %621 = vmatprep.subr.mxu0 0.0
    %622 = vmatpush1.msra.mxu0 0.0
    %623 = vmatprep.subr.mxu0 0.0
    %624 = vmatpush1.msra.mxu0 0.0
    %625 = vmatprep.subr.mxu0 0.0
    %626 = vmatpush1.msra.mxu0 0.0
    %627 = vmatprep.subr.mxu0 0.0
    %628 = vmatpush1.msra.mxu0 0.0
    %629 = vmatprep.subr.mxu0 0.0
    %630 = vmatpush1.msra.mxu0 %v588
    %631 = vmatprep.subr.mxu0 0.0
    %632 = vmatpush1.msra.mxu0 %v587
    %633 = vmatprep.subr.mxu0 0.0
    %634 = vmatpush1.msra.mxu0 %v586
    %635 = vmatprep.subr.mxu0 0.0
    %636 = vmatpush1.msra.mxu0 %v585
    %637 = vmatprep.subr.mxu0 0.0
    %638 = vmatpush1.msra.mxu0 %v584
    %639 = vmatprep.subr.mxu0 0.0
    %640 = vmatpush1.msra.mxu0 %v583
    %641 = vmatprep.subr.mxu0 0.0
    %642 = vmatpush1.msra.mxu0 %v582
    %643 = vmatprep.subr.mxu0 0.0
    %644 = vmatpush1.msra.mxu0 %v581
    %645 = vmatprep.subr.mxu0 0.0
    %646 = vmatpush2.msra.mxu0 0.0
    %647 = vmatprep.subr.mxu0 0.0
    %648 = vmatpush2.msra.mxu0 0.0
    %649 = vmatprep.subr.mxu0 0.0
    %650 = vmatpush2.msra.mxu0 0.0
    %651 = vmatprep.subr.mxu0 0.0
    %652 = vmatpush2.msra.mxu0 0.0
    %653 = vmatprep.subr.mxu0 0.0
    %654 = vmatpush2.msra.mxu0 0.0
    %655 = vmatprep.subr.mxu0 0.0
    %656 = vmatpush2.msra.mxu0 0.0
    %657 = vmatprep.subr.mxu0 0.0
    %658 = vmatpush2.msra.mxu0 0.0
    %659 = vmatprep.subr.mxu0 0.0
    %660 = vmatpush2.msra.mxu0 0.0
    %661 = vmatprep.subr.mxu0 0.0
    %662 = vmatpush2.msra.mxu0 0.0
    %663 = vmatprep.subr.mxu0 0.0
    %664 = vmatpush2.msra.mxu0 0.0
    %665 = vmatprep.subr.mxu0 0.0
    %666 = vmatpush2.msra.mxu0 0.0
    %667 = vmatprep.subr.mxu0 0.0
    %668 = vmatpush2.msra.mxu0 0.0
    %669 = vmatprep.subr.mxu0 0.0
    %670 = vmatpush2.msra.mxu0 0.0
    %671 = vmatprep.subr.mxu0 0.0
    %672 = vmatpush2.msra.mxu0 0.0
    %673 = vmatprep.subr.mxu0 0.0
    %674 = vmatpush2.msra.mxu0 0.0
    %675 = vmatprep.subr.mxu0 0.0
    %676 = vmatpush2.msra.mxu0 0.0
    %677 = vmatprep.mubr.f32.mxu0 0.0
    %678 = vmatmul.mubr.f32.gmra.mxu0 %v590
    %v679 = vpop.f32.mrf.mxu0
    %v680 = vadd.f32 0.0, %v679
    %v681 = vpop.f32.mrf.mxu0
    %682 = vmatprep.mubr.f32.mxu0 0.0
    %683 = vmatmul.mubr.f32.gmra.mxu0 %v593
    %v684 = vpop.f32.mrf.mxu0
    %v685 = vadd.f32 0.0, %v684
    %v686 = vpop.f32.mrf.mxu0
    %687 = vmatprep.mubr.f32.mxu0 0.0
    %688 = vmatmul.mubr.f32.gmra.mxu0 %v596
    %v689 = vpop.f32.mrf.mxu0
    %v690 = vadd.f32 0.0, %v689
    %v691 = vpop.f32.mrf.mxu0
    %692 = vmatprep.mubr.f32.mxu0 0.0
    %693 = vmatmul.mubr.f32.gmra.mxu0 %v599
    %v694 = vpop.f32.mrf.mxu0
    %v695 = vadd.f32 0.0, %v694
    %v696 = vpop.f32.mrf.mxu0
    %697 = vmatprep.mubr.f32.mxu0 0.0
    %698 = vmatmul.mubr.f32.gmra.mxu0 %v602
    %v699 = vpop.f32.mrf.mxu0
    %v700 = vadd.f32 0.0, %v699
    %v701 = vpop.f32.mrf.mxu0
    %702 = vmatprep.mubr.f32.mxu0 0.0
    %703 = vmatmul.mubr.f32.gmra.mxu0 %v605
    %v704 = vpop.f32.mrf.mxu0
    %v705 = vadd.f32 0.0, %v704
    %v706 = vpop.f32.mrf.mxu0
    %707 = vmatprep.mubr.f32.mxu0 0.0
    %708 = vmatmul.mubr.f32.gmra.mxu0 %v608
    %v709 = vpop.f32.mrf.mxu0
    %v710 = vadd.f32 0.0, %v709
    %v711 = vpop.f32.mrf.mxu0
    %712 = vmatprep.mubr.f32.mxu0 0.0
    %713 = vmatmul.mubr.f32.gmra.mxu0 %v611
    %v714 = vpop.f32.mrf.mxu0
    %v715 = vadd.f32 0.0, %v714
    %v716 = vpop.f32.mrf.mxu0
    %717 = vdwg.mxu0
    %vm718 = vcmp.gt.f32.partialorder %v680, 0.0
    %vm719 = vcmp.gt.f32.partialorder %v685, 0.0
    %vm720 = vcmp.gt.f32.partialorder %v690, 0.0
    %vm721 = vcmp.gt.f32.partialorder %v695, 0.0
    %vm722 = vcmp.gt.f32.partialorder %v700, 0.0
    %vm723 = vcmp.gt.f32.partialorder %v705, 0.0
    %vm724 = vcmp.gt.f32.partialorder %v710, 0.0
    %vm725 = vcmp.gt.f32.partialorder %v715, 0.0
    %v726 = vmax.f32 %v680, 1.0
    %v727 = vmax.f32 %v685, 1.0
    %v728 = vmax.f32 %v690, 1.0
    %v729 = vmax.f32 %v695, 1.0
    %v730 = vmax.f32 %v700, 1.0
    %v731 = vmax.f32 %v705, 1.0
    %v732 = vmax.f32 %v710, 1.0
    %v733 = vmax.f32 %v715, 1.0
    %735 = vset.pattern.permute.xlu0 32
    %736 = vperm.xlu0 %735, %v726
    %v737 = vpop.permute.xlu0 %736
    %740 = vset.pattern.permute.xlu0 32
    %741 = vperm.xlu0 %740, %v727
    %v742 = vpop.permute.xlu0 %741
    %745 = vset.pattern.permute.xlu0 32
    %746 = vperm.xlu0 %745, %v728
    %v747 = vpop.permute.xlu0 %746
    %750 = vset.pattern.permute.xlu0 32
    %751 = vperm.xlu0 %750, %v729
    %v752 = vpop.permute.xlu0 %751
    %755 = vset.pattern.permute.xlu0 32
    %756 = vperm.xlu0 %755, %v730
    %v757 = vpop.permute.xlu0 %756
    %760 = vset.pattern.permute.xlu0 32
    %761 = vperm.xlu0 %760, %v731
    %v762 = vpop.permute.xlu0 %761
    %765 = vset.pattern.permute.xlu0 32
    %766 = vperm.xlu0 %765, %v732
    %v767 = vpop.permute.xlu0 %766
    %770 = vset.pattern.permute.xlu0 32
    %771 = vperm.xlu0 %770, %v733
    %v772 = vpop.permute.xlu0 %771
    %v774 = vrcp.pop %v737
    %v775 = vmul.f32 %v680, %v774
    %v776 = vrcp.pop %v742
    %v777 = vmul.f32 %v685, %v776
    %v778 = vrcp.pop %v747
    %v779 = vmul.f32 %v690, %v778
    %v780 = vrcp.pop %v752
    %v781 = vmul.f32 %v695, %v780
    %v782 = vrcp.pop %v757
    %v783 = vmul.f32 %v700, %v782
    %v784 = vrcp.pop %v762
    %v785 = vmul.f32 %v705, %v784
    %v786 = vrcp.pop %v767
    %v787 = vmul.f32 %v710, %v786
    %v788 = vrcp.pop %v772
    %v789 = vmul.f32 %v715, %v788
    %v790 = vsel %vm718, 1, 0
    %v791 = vsel %vm719, 1, 0
    %v792 = vsel %vm720, 1, 0
    %v793 = vsel %vm721, 1, 0
    %v794 = vsel %vm722, 1, 0
    %v795 = vsel %vm723, 1, 0
    %v796 = vsel %vm724, 1, 0
    %v797 = vsel %vm725, 1, 0
    %798 = vset.pattern.permute.xlu0 32
    %799 = vperm.xlu0 %798, %v790
    %v800 = vpop.permute.xlu0 %799
    %801 = vset.pattern.permute.xlu0 32
    %802 = vperm.xlu0 %801, %v791
    %v803 = vpop.permute.xlu0 %802
    %804 = vset.pattern.permute.xlu0 32
    %805 = vperm.xlu0 %804, %v792
    %v806 = vpop.permute.xlu0 %805
    %807 = vset.pattern.permute.xlu0 32
    %808 = vperm.xlu0 %807, %v793
    %v809 = vpop.permute.xlu0 %808
    %810 = vset.pattern.permute.xlu0 32
    %811 = vperm.xlu0 %810, %v794
    %v812 = vpop.permute.xlu0 %811
    %813 = vset.pattern.permute.xlu0 32
    %814 = vperm.xlu0 %813, %v795
    %v815 = vpop.permute.xlu0 %814
    %816 = vset.pattern.permute.xlu0 32
    %817 = vperm.xlu0 %816, %v796
    %v818 = vpop.permute.xlu0 %817
    %819 = vset.pattern.permute.xlu0 32
    %820 = vperm.xlu0 %819, %v797
    %v821 = vpop.permute.xlu0 %820
    %vm822 = vcmp.eq.s32.totalorder %v800, 1
    %vm823 = vcmp.eq.s32.totalorder %v803, 1
    %vm824 = vcmp.eq.s32.totalorder %v806, 1
    %vm825 = vcmp.eq.s32.totalorder %v809, 1
    %vm826 = vcmp.eq.s32.totalorder %v812, 1
    %vm827 = vcmp.eq.s32.totalorder %v815, 1
    %vm828 = vcmp.eq.s32.totalorder %v818, 1
    %vm829 = vcmp.eq.s32.totalorder %v821, 1
    %v830 = vsel %vm822, %v775, 0.0
    %v831 = vsel %vm823, %v777, 0.0
    %v832 = vsel %vm824, %v779, 0.0
    %v833 = vsel %vm825, %v781, 0.0
    %v834 = vsel %vm826, %v783, 0.0
    %v835 = vsel %vm827, %v785, 0.0
    %v836 = vsel %vm828, %v787, 0.0
    %v837 = vsel %vm829, %v789, 0.0
    %vm838 = vcmp.ge.f32.partialorder %v830, 0.0
    %vm839 = vcmp.ge.f32.partialorder %v831, 0.0
    %vm840 = vcmp.ge.f32.partialorder %v832, 0.0
    %vm841 = vcmp.ge.f32.partialorder %v833, 0.0
    %vm842 = vcmp.ge.f32.partialorder %v834, 0.0
    %vm843 = vcmp.ge.f32.partialorder %v835, 0.0
    %vm844 = vcmp.ge.f32.partialorder %v836, 0.0
    %vm845 = vcmp.ge.f32.partialorder %v837, 0.0
    %v846 = vmul.f32 %v830, 0.01
    %v847 = vmul.f32 %v831, 0.01
    %v848 = vmul.f32 %v832, 0.01
    %v849 = vmul.f32 %v833, 0.01
    %v850 = vmul.f32 %v834, 0.01
    %v851 = vmul.f32 %v835, 0.01
    %v852 = vmul.f32 %v836, 0.01
    %v853 = vmul.f32 %v837, 0.01
    %v854 = vsel %vm838, %v830, %v846
    %v855 = vsel %vm839, %v831, %v847
    %v856 = vsel %vm840, %v832, %v848
    %v857 = vsel %vm841, %v833, %v849
    %v858 = vsel %vm842, %v834, %v850
    %v859 = vsel %vm843, %v835, %v851
    %v860 = vsel %vm844, %v836, %v852
    %v861 = vsel %vm845, %v837, %v853
    %v862 = vadd.f32 %v854, %v24
    %v863 = vadd.f32 %v855, %v25
    %v864 = vadd.f32 %v856, %v26
    %v865 = vadd.f32 %v857, %v27
    %v866 = vadd.f32 %v858, %v28
    %v867 = vadd.f32 %v859, %v29
    %v868 = vadd.f32 %v860, %v30
    %v869 = vadd.f32 %v861, %v31
    %v870 = vsel %vm357, %v862, 0.0
    %871 = vadd.xlane.f32.xlu0 %v870
    %v872 = vpop.xlane.xlu0 %871
    %v873 = vsel %vm357, %v863, 0.0
    %874 = vadd.xlane.f32.xlu0 %v873
    %v875 = vpop.xlane.xlu0 %874
    %v876 = vsel %vm357, %v864, 0.0
    %877 = vadd.xlane.f32.xlu0 %v876
    %v878 = vpop.xlane.xlu0 %877
    %v879 = vsel %vm357, %v865, 0.0
    %880 = vadd.xlane.f32.xlu0 %v879
    %v881 = vpop.xlane.xlu0 %880
    %v882 = vsel %vm357, %v866, 0.0
    %883 = vadd.xlane.f32.xlu0 %v882
    %v884 = vpop.xlane.xlu0 %883
    %v885 = vsel %vm357, %v867, 0.0
    %886 = vadd.xlane.f32.xlu0 %v885
    %v887 = vpop.xlane.xlu0 %886
    %v888 = vsel %vm357, %v868, 0.0
    %889 = vadd.xlane.f32.xlu0 %v888
    %v890 = vpop.xlane.xlu0 %889
    %v891 = vsel %vm357, %v869, 0.0
    %892 = vadd.xlane.f32.xlu0 %v891
    %v893 = vpop.xlane.xlu0 %892
    %v894 = vmul.f32 %v872, 0.03125
    %v895 = vmul.f32 %v875, 0.03125
    %v896 = vmul.f32 %v878, 0.03125
    %v897 = vmul.f32 %v881, 0.03125
    %v898 = vmul.f32 %v884, 0.03125
    %v899 = vmul.f32 %v887, 0.03125
    %v900 = vmul.f32 %v890, 0.03125
    %v901 = vmul.f32 %v893, 0.03125
    %v902 = vmul.f32 %v862, %v862
    %v903 = vmul.f32 %v863, %v863
    %v904 = vmul.f32 %v864, %v864
    %v905 = vmul.f32 %v865, %v865
    %v906 = vmul.f32 %v866, %v866
    %v907 = vmul.f32 %v867, %v867
    %v908 = vmul.f32 %v868, %v868
    %v909 = vmul.f32 %v869, %v869
    %v910 = vsel %vm357, %v902, 0.0
    %911 = vadd.xlane.f32.xlu0 %v910
    %v912 = vpop.xlane.xlu0 %911
    %v913 = vsel %vm357, %v903, 0.0
    %914 = vadd.xlane.f32.xlu0 %v913
    %v915 = vpop.xlane.xlu0 %914
    %v916 = vsel %vm357, %v904, 0.0
    %917 = vadd.xlane.f32.xlu0 %v916
    %v918 = vpop.xlane.xlu0 %917
    %v919 = vsel %vm357, %v905, 0.0
    %920 = vadd.xlane.f32.xlu0 %v919
    %v921 = vpop.xlane.xlu0 %920
    %v922 = vsel %vm357, %v906, 0.0
    %923 = vadd.xlane.f32.xlu0 %v922
    %v924 = vpop.xlane.xlu0 %923
    %v925 = vsel %vm357, %v907, 0.0
    %926 = vadd.xlane.f32.xlu0 %v925
    %v927 = vpop.xlane.xlu0 %926
    %v928 = vsel %vm357, %v908, 0.0
    %929 = vadd.xlane.f32.xlu0 %v928
    %v930 = vpop.xlane.xlu0 %929
    %v931 = vsel %vm357, %v909, 0.0
    %932 = vadd.xlane.f32.xlu0 %v931
    %v933 = vpop.xlane.xlu0 %932
    %v934 = vmul.f32 %v912, 0.03125
    %v935 = vmul.f32 %v915, 0.03125
    %v936 = vmul.f32 %v918, 0.03125
    %v937 = vmul.f32 %v921, 0.03125
    %v938 = vmul.f32 %v924, 0.03125
    %v939 = vmul.f32 %v927, 0.03125
    %v940 = vmul.f32 %v930, 0.03125
    %v941 = vmul.f32 %v933, 0.03125
    %v942 = vmul.f32 %v894, %v894
    %v943 = vmul.f32 %v895, %v895
    %v944 = vmul.f32 %v896, %v896
    %v945 = vmul.f32 %v897, %v897
    %v946 = vmul.f32 %v898, %v898
    %v947 = vmul.f32 %v899, %v899
    %v948 = vmul.f32 %v900, %v900
    %v949 = vmul.f32 %v901, %v901
    %v950 = vsub.f32 %v934, %v942
    %v951 = vsub.f32 %v935, %v943
    %v952 = vsub.f32 %v936, %v944
    %v953 = vsub.f32 %v937, %v945
    %v954 = vsub.f32 %v938, %v946
    %v955 = vsub.f32 %v939, %v947
    %v956 = vsub.f32 %v940, %v948
    %v957 = vsub.f32 %v941, %v949
    %v958 = vsub.f32 %v862, %v894
    %v959 = vsub.f32 %v863, %v895
    %v960 = vsub.f32 %v864, %v896
    %v961 = vsub.f32 %v865, %v897
    %v962 = vsub.f32 %v866, %v898
    %v963 = vsub.f32 %v867, %v899
    %v964 = vsub.f32 %v868, %v900
    %v965 = vsub.f32 %v869, %v901
    %v966 = vadd.f32 %v950, 1e-05
    %v967 = vadd.f32 %v951, 1e-05
    %v968 = vadd.f32 %v952, 1e-05
    %v969 = vadd.f32 %v953, 1e-05
    %v970 = vadd.f32 %v954, 1e-05
    %v971 = vadd.f32 %v955, 1e-05
    %v972 = vadd.f32 %v956, 1e-05
    %v973 = vadd.f32 %v957, 1e-05
    %v974 = vrsqrt.pop %v966
    %v975 = vrsqrt.pop %v967
    %v976 = vrsqrt.pop %v968
    %v977 = vrsqrt.pop %v969
    %v978 = vrsqrt.pop %v970
    %v979 = vrsqrt.pop %v971
    %v980 = vrsqrt.pop %v972
    %v981 = vrsqrt.pop %v973
    %v982 = vmul.f32 %v958, %v974
    %v983 = vmul.f32 %v959, %v975
    %v984 = vmul.f32 %v960, %v976
    %v985 = vmul.f32 %v961, %v977
    %v986 = vmul.f32 %v962, %v978
    %v987 = vmul.f32 %v963, %v979
    %v988 = vmul.f32 %v964, %v980
    %v989 = vmul.f32 %v965, %v981
    %v990 = vlaneseq
    %v991 = vshrl.u32 %v990, 7
    %v992 = vsub.s32 0, %v991
    %v993 = vrot.slane %v79, %v992
    %v994 = vmul.f32 %v982, %v993
    %v995 = vmul.f32 %v983, %v993
    %v996 = vmul.f32 %v984, %v993
    %v997 = vmul.f32 %v985, %v993
    %v998 = vmul.f32 %v986, %v993
    %v999 = vmul.f32 %v987, %v993
    %v1000 = vmul.f32 %v988, %v993
    %v1001 = vmul.f32 %v989, %v993
    %v1002 = vlaneseq
    %v1003 = vshrl.u32 %v1002, 7
    %v1004 = vsub.s32 0, %v1003
    %v1005 = vrot.slane %v80, %v1004
    %v1006 = vadd.f32 %v994, %v1005
    %v1007 = vadd.f32 %v995, %v1005
    %v1008 = vadd.f32 %v996, %v1005
    %v1009 = vadd.f32 %v997, %v1005
    %v1010 = vadd.f32 %v998, %v1005
    %v1011 = vadd.f32 %v999, %v1005
    %v1012 = vadd.f32 %v1000, %v1005
    %v1013 = vadd.f32 %v1001, %v1005
    %1014 = vst.msk [vmem:[#allocation2] sm:$0xff] %vm357, %v1006
    %1015 = vst.msk [vmem:[#allocation2 + $0x8] sm:$0xff] %vm357, %v1007
    %1016 = vst.msk [vmem:[#allocation2 + $0x10] sm:$0xff] %vm357, %v1008
    %1017 = vst.msk [vmem:[#allocation2 + $0x18] sm:$0xff] %vm357, %v1009
    %1018 = vst.msk [vmem:[#allocation2 + $0x20] sm:$0xff] %vm357, %v1010
    %1019 = vst.msk [vmem:[#allocation2 + $0x28] sm:$0xff] %vm357, %v1011
    %1020 = vst.msk [vmem:[#allocation2 + $0x30] sm:$0xff] %vm357, %v1012
    %1021 = vst.msk [vmem:[#allocation2 + $0x38] sm:$0xff] %vm357, %v1013
    // Predicated region
    $region26: #{message_passing_forward.1} parent=1 // pred_check
      _
    $region27: #{message_passing_forward.1} parent=1 // pred_check_branch
      %1023 = sbr.rel (0) target = $region29
    $region28: #{message_passing_forward.1} parent=1 // pred_region
      %s1025 = ssub.s32 1024, 1024
      %1026 = vsyncadd [#allocation3], %s1025
      %s1027 = sshll.u32 [#allocation2], 4
      %s1028 = int_to_ptr.vmem [resolvable:$true] %s1027
      %1033 = dma.vmem_to_hbm [thread:$0]  %s1028, 1024, %s6, [#allocation3], 128, 128, 8
    $region29: #{message_passing_forward.1} parent=1 // pred_fallthru
      _
    // Predicated region
    $region30: #{message_passing_forward.1} parent=1 // pred_check
      _
    $region31: #{message_passing_forward.1} parent=1 // pred_check_branch
      %1035 = sbr.rel (0) target = $region33
    $region32: #{message_passing_forward.1} parent=1 // pred_region
      %1036 = dma.done [#allocation3], 1024
    $region33: #{message_passing_forward.1} parent=1 // pred_fallthru
      _
    %1037 = vsyncpa [#allocation3], 1

</llo_original>
